<compile_context>
chip_gen: v7x
topology: tpu7x:2x2x1
jax: 0.10.0
libtpu: 0.0.40
codegen_flags: <defaults>
</compile_context>

<pallas_src>
import functools
import math

import jax
import jax.numpy as jnp
from jax.experimental import pallas as pl
from jax.experimental.pallas import tpu as pltpu


# ----------------------------- Pallas kernel --------------------------------
def _wxc_kernel(patches_ref, w_emb_ref, pos_ref, gamma_ref, beta_ref,
                w1_ref, b1_ref, w_head_ref, w2h_ref, b_fused_ref, out_ref):
    """Fused backbone (patch-embed + LN + MLP + residual) and head (linear).

    One grid step processes a TILE_M-row slab of the token matrix.  Matmul
    operands are bf16 (MXU native); accumulation, LayerNorm statistics, GELU
    and bias adds are f32.  The residual + head are algebraically folded:
        out = tok @ w_head + gelu(xn@w1+b1) @ (w2@w_head) + (b2@w_head + b_head)
    which equals (tok + MLP(LN(tok))) @ w_head + b_head.
    """
    # ---- backbone: patch embedding (bf16 MXU matmul, f32 accumulate) ----
    tok = jnp.dot(patches_ref[...], w_emb_ref[...],
                  preferred_element_type=jnp.float32)
    tok = tok + pos_ref[...]            # pos tile has b_emb folded in (f32)

    # ---- backbone: one-pass LayerNorm stats over feature dim (f32) ----
    embed = tok.shape[-1]
    inv_e = jnp.float32(1.0 / embed)
    s1 = jnp.sum(tok, axis=-1, keepdims=True)
    s2 = jnp.sum(tok * tok, axis=-1, keepdims=True)
    mu = s1 * inv_e
    var = s2 * inv_e - mu * mu
    xn = (tok - mu) * jax.lax.rsqrt(var + 1e-5)
    xn = xn * gamma_ref[...] + beta_ref[...]

    # ---- backbone: MLP first matmul + tanh-GELU (EUP, f32) ----
    h = jnp.dot(xn.astype(jnp.bfloat16), w1_ref[...],
                preferred_element_type=jnp.float32) + b1_ref[...]
    c = jnp.float32(0.7978845608028654)  # sqrt(2/pi); nn.GELU(approximate='tanh')
    g = 0.5 * h * (1.0 + jnp.tanh(c * (h + 0.044715 * h * h * h)))

    # ---- folded residual + head: two independent lane-dense matmuls ----
    out = jnp.dot(tok.astype(jnp.bfloat16), w_head_ref[...],
                  preferred_element_type=jnp.float32)
    out = out + jnp.dot(g.astype(jnp.bfloat16), w2h_ref[...],
                        preferred_element_type=jnp.float32)
    out = out + b_fused_ref[...]
    out_ref[...] = out.astype(out_ref.dtype)   # bf16, lane-dense unmasked vst


def _fused_forward(patches, params, *, tile_m, n_tokens, out_pad,
                   embed, hidden):
    """Run the fused Pallas kernel over the token matrix [rows, K]."""
    n_rows, k_in = patches.shape

    # tile_m is chosen to divide n_rows for realistic batches; the pad below
    # is then a no-op (no extra HBM copy).  Padded rows (if any) produce
    # finite garbage (LN on zeros) and are sliced off by the caller.
    grid_m = pl.cdiv(n_rows, tile_m)
    rows_pad = grid_m * tile_m
    if rows_pad != n_rows:
        patches = jnp.pad(patches, ((0, rows_pad - n_rows), (0, 0)))

    # Per-tile positional embedding (+ folded b_emb).  TILE_M is a multiple of
    # T, so each tile sees token indices 0..T-1 repeating.  Tiny, VMEM-resident.
    pos_tile = jnp.tile(params["pos_fused"], (tile_m // n_tokens, 1))

    operands = (
        patches,                                          # bf16 token stream
        params["w_emb"], pos_tile,
        params["gamma"], params["beta"],
        params["w1"], params["b1"],
        params["w_head"], params["w2h"], params["b_fused"],
    )

    def _const(shape):
        # Weights/biases: constant index_map -> VMEM resident across the grid.
        return pl.BlockSpec(shape, lambda i: (0,) * len(shape))

    in_specs = [
        pl.BlockSpec((tile_m, k_in), lambda i: (i, 0)),   # patches (streamed)
        _const((k_in, embed)),                            # w_emb
        _const((tile_m, embed)),                          # pos (+ b_emb) tile
        _const((1, embed)),                               # gamma
        _const((1, embed)),                               # beta
        _const((embed, hidden)),                          # w1
        _const((1, hidden)),                              # b1
        _const((embed, out_pad)),                         # w_head (lane-padded)
        _const((hidden, out_pad)),                        # w2 @ w_head
        _const((1, out_pad)),                             # b2 @ w_head + b_head
    ]
    out_specs = pl.BlockSpec((tile_m, out_pad), lambda i: (i, 0))

    # Advisory cost model for XLA scheduling around the kernel.
    flops = 2 * rows_pad * (k_in * embed + embed * hidden
                            + hidden * out_pad + embed * out_pad)
    weight_bytes = 2 * (k_in * embed + embed * hidden
                        + embed * out_pad + hidden * out_pad)
    bytes_accessed = (rows_pad * k_in * 2          # bf16 patch stream in
                      + rows_pad * out_pad * 2     # bf16 output
                      + weight_bytes)
    cost = pl.CostEstimate(flops=flops,
                           transcendentals=rows_pad * hidden,
                           bytes_accessed=bytes_accessed)

    out = pl.pallas_call(
        _wxc_kernel,
        grid=(grid_m,),
        in_specs=in_specs,
        out_specs=out_specs,
        out_shape=jax.ShapeDtypeStruct((rows_pad, out_pad), jnp.bfloat16),
        compiler_params=pltpu.CompilerParams(
            dimension_semantics=("parallel",),      # shard rows across TCs (v7x)
            vmem_limit_bytes=32 * 1024 * 1024,      # safe on v7x's 64 MiB VMEM
        ),
        cost_estimate=cost,
    )(*operands)

    return out[:n_rows]                             # drop row padding (glue)


# ------------------------------ wrapper class --------------------------------
class WxCModuleWrapperPallas:
    """JAX/Pallas equivalent of WxCModuleWrapper around a synthetic WxC module."""

    # Lane width of the vreg / unmasked-store granularity.
    _LANES = 128
    # Target row-tile size: per-step overhead (~0.35 us) amortised over 2048
    # rows; double-buffered footprint still only a few MiB on every generation.
    _TARGET_TILE_M = 2048

    def __init__(self, in_ch=4, img=16, patch=4, embed=32, hidden=128):
        self.in_ch, self.img, self.patch = in_ch, img, patch
        self.embed, self.hidden = embed, hidden
        self.tokens_per_side = img // patch
        self.n_tokens = self.tokens_per_side ** 2
        self.k_in = in_ch * patch * patch
        # Head output padded to a multiple of 128 lanes (lane-dense stores).
        self.out_pad = ((self.k_in + self._LANES - 1)
                        // self._LANES) * self._LANES

        key = jax.random.PRNGKey(0)
        keys = jax.random.split(key, 8)

        def init_f32(k, shape, scale):
            return scale * jax.random.normal(k, shape, dtype=jnp.float32)

        # f32 masters (for the host-side algebraic folds), bf16 stored copies.
        w_emb_f = init_f32(keys[0], (self.k_in, embed), 0.02)
        pos_f = init_f32(keys[1], (self.n_tokens, embed), 0.02)
        w1_f = init_f32(keys[2], (embed, hidden), 0.02)
        w2_f = init_f32(keys[3], (hidden, embed), 0.02)
        w_head_f = init_f32(keys[4], (embed, self.k_in), 0.02)
        b_emb_f = jnp.zeros((1, embed), jnp.float32)
        b2_f = jnp.zeros((1, embed), jnp.float32)
        b_head_f = jnp.zeros((1, self.k_in), jnp.float32)

        pad = ((0, 0), (0, self.out_pad - self.k_in))
        w_head_pad = jnp.pad(w_head_f, pad)                       # [E, out_pad]
        # Fold the residual + head: w2h = w2 @ w_head, b_fused = b2@w_head+b_head.
        w2h = jnp.pad(w2_f @ w_head_f, pad)                       # [H, out_pad]
        b_fused = jnp.pad(b2_f @ w_head_f + b_head_f, pad)        # [1, out_pad]

        self.params = {
            # backbone (matmul weights stored bf16; bias/LN/pos in f32)
            "w_emb":     w_emb_f.astype(jnp.bfloat16),
            "pos_fused": pos_f + b_emb_f,                         # b_emb folded
            "gamma":     jnp.ones((1, embed), jnp.float32),
            "beta":      jnp.zeros((1, embed), jnp.float32),
            "w1":        w1_f.astype(jnp.bfloat16),
            "b1":        jnp.zeros((1, hidden), jnp.float32),
            # folded residual + head
            "w_head":    w_head_pad.astype(jnp.bfloat16),
            "w2h":       w2h.astype(jnp.bfloat16),
            "b_fused":   b_fused,                                 # f32
        }

    def freeze_encoder(self):
        # TODO(synk): gradient freezing (requires_grad=False) is a training-time
        # concern with no forward-pass / Pallas equivalent; no-op here.
        pass

    def freeze_decoder(self):
        # TODO(synk): see freeze_encoder.
        pass

    def _row_tile(self, n_rows):
        """Row tile: multiple of lcm(T, 16) (pos alignment + bf16 sublane
        packing), an exact divisor of n_rows (no pad copy), capped at the
        target, and split so the grid has >= 2 steps when rows permit (v7x
        megacore gets work; cost on v5e/v6e is one extra ~0.35 us step)."""
        base = (self.n_tokens * 16) // math.gcd(self.n_tokens, 16)  # lcm(T, 16)
        if n_rows % base != 0:
            return base                      # fall back to the padded path
        q = n_rows // base
        best = 1
        for d in range(1, q + 1):
            if q % d == 0 and base * d <= self._TARGET_TILE_M:
                best = d
        if best == q and q > 1:
            # Whole problem fit in one step: split into >=2 aligned steps.
            best = max(d for d in range(1, q) if q % d == 0)
        return base * best

    @functools.partial(jax.jit, static_argnums=0)
    def forward(self, x):
        """x: [B, C, H, W] (NCHW, matching the PyTorch module). Returns NCHW."""
        B, C, H, W = x.shape
        p, hp = self.patch, self.tokens_per_side

        # NCHW image -> token matrix [B*T, C*p*p]  (glue; bf16 cast fuses with
        # the transpose copy — no separate HBM pass).
        patches = x.reshape(B, C, hp, p, hp, p)
        patches = patches.transpose(0, 2, 4, 1, 3, 5)      # [B, Hp, Wp, C, p, p]
        patches = patches.reshape(B * self.n_tokens, C * p * p)
        patches = patches.astype(jnp.bfloat16)

        n_rows = B * self.n_tokens
        tile_m = self._row_tile(n_rows)

        out = _fused_forward(
            patches, self.params,
            tile_m=tile_m, n_tokens=self.n_tokens, out_pad=self.out_pad,
            embed=self.embed, hidden=self.hidden,
        )                                                  # [B*T, out_pad] bf16

        # drop lane padding, token matrix -> NCHW image (glue; f32 cast fuses
        # with the un-patchify copy)
        out = out[:, :self.k_in].astype(jnp.float32)
        out = out.reshape(B, hp, hp, C, p, p)
        out = out.transpose(0, 3, 1, 4, 2, 5)              # [B, C, Hp, p, Wp, p]
        out = out.reshape(B, C, H, W)
        # ModelOutput(mo) just wraps the tensor; return the array directly.
        return out


# ---------------------------------- main -------------------------------------
if __name__ == "__main__":
    B, C, H, W = 2, 4, 16, 16
    key = jax.random.PRNGKey(0)
    x = jax.random.normal(key, (B, C, H, W), dtype=jnp.float32)

    model = WxCModuleWrapperPallas(in_ch=C, img=H, patch=4, embed=32, hidden=128)
    y = model.forward(x)
    y = jax.block_until_ready(y)

    assert y.shape == (B, C, H, W), y.shape
    assert bool(jnp.all(jnp.isfinite(y)))
    print("KERNEL_OK")
</pallas_src>

<mosaic_0001>
module attributes {stable_mosaic.version = 11 : i64} {
  func.func @_wxc_kernel(%arg0: i32, %arg1: memref<16x64xbf16, #tpu.memory_space<vmem>>, %arg2: memref<64x32xbf16, #tpu.memory_space<vmem>>, %arg3: memref<16x32xf32, #tpu.memory_space<vmem>>, %arg4: memref<1x32xf32, #tpu.memory_space<vmem>>, %arg5: memref<1x32xf32, #tpu.memory_space<vmem>>, %arg6: memref<32x128xbf16, #tpu.memory_space<vmem>>, %arg7: memref<1x128xf32, #tpu.memory_space<vmem>>, %arg8: memref<32x128xbf16, #tpu.memory_space<vmem>>, %arg9: memref<128x128xbf16, #tpu.memory_space<vmem>>, %arg10: memref<1x128xf32, #tpu.memory_space<vmem>>, %arg11: memref<16x128xbf16, #tpu.memory_space<vmem>>) attributes {dimension_semantics = [#tpu.dimension_semantics<parallel>], iteration_bounds = array<i64: 2>, scalar_prefetch = 0 : i64, scratch_operands = 0 : i64, tpu.core_type = #tpu.core_type<tc>, window_params = [{transform_indices = @transform_0, window_bounds = array<i64: 16, 64>}, {pipeline_mode = #tpu.pipeline_mode<synchronous>, transform_indices = @transform_1, window_bounds = array<i64: 64, 32>}, {pipeline_mode = #tpu.pipeline_mode<synchronous>, transform_indices = @transform_2, window_bounds = array<i64: 16, 32>}, {pipeline_mode = #tpu.pipeline_mode<synchronous>, transform_indices = @transform_3, window_bounds = array<i64: 1, 32>}, {pipeline_mode = #tpu.pipeline_mode<synchronous>, transform_indices = @transform_4, window_bounds = array<i64: 1, 32>}, {pipeline_mode = #tpu.pipeline_mode<synchronous>, transform_indices = @transform_5, window_bounds = array<i64: 32, 128>}, {pipeline_mode = #tpu.pipeline_mode<synchronous>, transform_indices = @transform_6, window_bounds = array<i64: 1, 128>}, {pipeline_mode = #tpu.pipeline_mode<synchronous>, transform_indices = @transform_7, window_bounds = array<i64: 32, 128>}, {pipeline_mode = #tpu.pipeline_mode<synchronous>, transform_indices = @transform_8, window_bounds = array<i64: 128, 128>}, {pipeline_mode = #tpu.pipeline_mode<synchronous>, transform_indices = @transform_9, window_bounds = array<i64: 1, 128>}, {transform_indices = @transform_10, window_bounds = array<i64: 16, 128>}]} {
    %c0 = arith.constant 0 : index
    %c0_0 = arith.constant 0 : index
    %0 = vector.load %arg1[%c0, %c0_0] : memref<16x64xbf16, #tpu.memory_space<vmem>>, vector<16x64xbf16>
    %c0_1 = arith.constant 0 : index
    %c0_2 = arith.constant 0 : index
    %1 = vector.load %arg2[%c0_1, %c0_2] : memref<64x32xbf16, #tpu.memory_space<vmem>>, vector<64x32xbf16>
    %cst = arith.constant dense<0.000000e+00> : vector<16x32xf32>
    %2 = tpu.matmul %0, %1, %cst {dimension_numbers = #tpu.dot_dimension_numbers<[1], [0], [0], [1], [0, 0, 1, 1], [], []>} : vector<16x64xbf16>, vector<64x32xbf16>, vector<16x32xf32> -> vector<16x32xf32>
    %c0_3 = arith.constant 0 : index
    %c0_4 = arith.constant 0 : index
    %3 = vector.load %arg3[%c0_3, %c0_4] : memref<16x32xf32, #tpu.memory_space<vmem>>, vector<16x32xf32>
    %4 = arith.addf %2, %3 : vector<16x32xf32>
    %cst_5 = arith.constant dense<0.000000e+00> : vector<16xf32>
    %5 = vector.multi_reduction <add>, %4, %cst_5 [1] : vector<16x32xf32> to vector<16xf32>
    %6 = vector.shape_cast %5 : vector<16xf32> to vector<16x1xf32>
    %7 = arith.mulf %4, %4 : vector<16x32xf32>
    %cst_6 = arith.constant dense<0.000000e+00> : vector<16xf32>
    %8 = vector.multi_reduction <add>, %7, %cst_6 [1] : vector<16x32xf32> to vector<16xf32>
    %9 = vector.shape_cast %8 : vector<16xf32> to vector<16x1xf32>
    %cst_7 = arith.constant 3.125000e-02 : f32
    %10 = vector.broadcast %cst_7 : f32 to vector<16x1xf32>
    %11 = arith.mulf %6, %10 : vector<16x1xf32>
    %cst_8 = arith.constant 3.125000e-02 : f32
    %12 = vector.broadcast %cst_8 : f32 to vector<16x1xf32>
    %13 = arith.mulf %9, %12 : vector<16x1xf32>
    %14 = arith.mulf %11, %11 : vector<16x1xf32>
    %15 = arith.subf %13, %14 : vector<16x1xf32>
    %16 = vector.broadcast %11 : vector<16x1xf32> to vector<16x32xf32>
    %17 = arith.subf %4, %16 : vector<16x32xf32>
    %cst_9 = arith.constant 9.99999974E-6 : f32
    %18 = vector.broadcast %cst_9 : f32 to vector<16x1xf32>
    %19 = arith.addf %15, %18 : vector<16x1xf32>
    %20 = math.rsqrt %19 : vector<16x1xf32>
    %21 = vector.broadcast %20 : vector<16x1xf32> to vector<16x32xf32>
    %22 = arith.mulf %17, %21 : vector<16x32xf32>
    %c0_10 = arith.constant 0 : index
    %c0_11 = arith.constant 0 : index
    %23 = vector.load %arg4[%c0_10, %c0_11] : memref<1x32xf32, #tpu.memory_space<vmem>>, vector<1x32xf32>
    %24 = vector.broadcast %23 : vector<1x32xf32> to vector<16x32xf32>
    %25 = arith.mulf %22, %24 : vector<16x32xf32>
    %c0_12 = arith.constant 0 : index
    %c0_13 = arith.constant 0 : index
    %26 = vector.load %arg5[%c0_12, %c0_13] : memref<1x32xf32, #tpu.memory_space<vmem>>, vector<1x32xf32>
    %27 = vector.broadcast %26 : vector<1x32xf32> to vector<16x32xf32>
    %28 = arith.addf %25, %27 : vector<16x32xf32>
    %29 = arith.truncf %28 : vector<16x32xf32> to vector<16x32xbf16>
    %c0_14 = arith.constant 0 : index
    %c0_15 = arith.constant 0 : index
    %30 = vector.load %arg6[%c0_14, %c0_15] : memref<32x128xbf16, #tpu.memory_space<vmem>>, vector<32x128xbf16>
    %cst_16 = arith.constant dense<0.000000e+00> : vector<16x128xf32>
    %31 = tpu.matmul %29, %30, %cst_16 {dimension_numbers = #tpu.dot_dimension_numbers<[1], [0], [0], [1], [0, 0, 1, 1], [], []>} : vector<16x32xbf16>, vector<32x128xbf16>, vector<16x128xf32> -> vector<16x128xf32>
    %c0_17 = arith.constant 0 : index
    %c0_18 = arith.constant 0 : index
    %32 = vector.load %arg7[%c0_17, %c0_18] : memref<1x128xf32, #tpu.memory_space<vmem>>, vector<1x128xf32>
    %33 = vector.broadcast %32 : vector<1x128xf32> to vector<16x128xf32>
    %34 = arith.addf %31, %33 : vector<16x128xf32>
    %cst_19 = arith.constant 5.000000e-01 : f32
    %35 = vector.broadcast %cst_19 : f32 to vector<16x128xf32>
    %36 = arith.mulf %35, %34 : vector<16x128xf32>
    %cst_20 = arith.constant 4.471500e-02 : f32
    %37 = vector.broadcast %cst_20 : f32 to vector<16x128xf32>
    %38 = arith.mulf %37, %34 : vector<16x128xf32>
    %39 = arith.mulf %38, %34 : vector<16x128xf32>
    %40 = arith.mulf %39, %34 : vector<16x128xf32>
    %41 = arith.addf %34, %40 : vector<16x128xf32>
    %cst_21 = arith.constant 0.797884583 : f32
    %42 = vector.broadcast %cst_21 : f32 to vector<16x128xf32>
    %43 = arith.mulf %42, %41 : vector<16x128xf32>
    %44 = math.tanh %43 : vector<16x128xf32>
    %cst_22 = arith.constant 1.000000e+00 : f32
    %45 = vector.broadcast %cst_22 : f32 to vector<16x128xf32>
    %46 = arith.addf %45, %44 : vector<16x128xf32>
    %47 = arith.mulf %36, %46 : vector<16x128xf32>
    %48 = arith.truncf %4 : vector<16x32xf32> to vector<16x32xbf16>
    %c0_23 = arith.constant 0 : index
    %c0_24 = arith.constant 0 : index
    %49 = vector.load %arg8[%c0_23, %c0_24] : memref<32x128xbf16, #tpu.memory_space<vmem>>, vector<32x128xbf16>
    %cst_25 = arith.constant dense<0.000000e+00> : vector<16x128xf32>
    %50 = tpu.matmul %48, %49, %cst_25 {dimension_numbers = #tpu.dot_dimension_numbers<[1], [0], [0], [1], [0, 0, 1, 1], [], []>} : vector<16x32xbf16>, vector<32x128xbf16>, vector<16x128xf32> -> vector<16x128xf32>
    %51 = arith.truncf %47 : vector<16x128xf32> to vector<16x128xbf16>
    %c0_26 = arith.constant 0 : index
    %c0_27 = arith.constant 0 : index
    %52 = vector.load %arg9[%c0_26, %c0_27] : memref<128x128xbf16, #tpu.memory_space<vmem>>, vector<128x128xbf16>
    %cst_28 = arith.constant dense<0.000000e+00> : vector<16x128xf32>
    %53 = tpu.matmul %51, %52, %cst_28 {dimension_numbers = #tpu.dot_dimension_numbers<[1], [0], [0], [1], [0, 0, 1, 1], [], []>} : vector<16x128xbf16>, vector<128x128xbf16>, vector<16x128xf32> -> vector<16x128xf32>
    %54 = arith.addf %50, %53 : vector<16x128xf32>
    %c0_29 = arith.constant 0 : index
    %c0_30 = arith.constant 0 : index
    %55 = vector.load %arg10[%c0_29, %c0_30] : memref<1x128xf32, #tpu.memory_space<vmem>>, vector<1x128xf32>
    %56 = vector.broadcast %55 : vector<1x128xf32> to vector<16x128xf32>
    %57 = arith.addf %54, %56 : vector<16x128xf32>
    %58 = arith.truncf %57 : vector<16x128xf32> to vector<16x128xbf16>
    %c0_31 = arith.constant 0 : index
    %c0_32 = arith.constant 0 : index
    %59 = vector.load %arg11[%c0_31, %c0_32] : memref<16x128xbf16, #tpu.memory_space<vmem>>, vector<16x128xbf16>
    tpu.vector_store %arg11[%c0_31, %c0_32], %58 {strides = array<i32>} : memref<16x128xbf16, #tpu.memory_space<vmem>>, vector<16x128xbf16>,
    return
  }
  func.func @transform_0(%arg0: i32) -> (i32, i32) {
    %c0_i32 = arith.constant 0 : i32
    %c0_i32_0 = arith.constant 0 : i32
    return %arg0, %c0_i32 : i32, i32
  }
  func.func @transform_1(%arg0: i32) -> (i32, i32) {
    %c0_i32 = arith.constant 0 : i32
    %c0_i32_0 = arith.constant 0 : i32
    %c0_i32_1 = arith.constant 0 : i32
    return %c0_i32, %c0_i32_0 : i32, i32
  }
  func.func @transform_2(%arg0: i32) -> (i32, i32) {
    %c0_i32 = arith.constant 0 : i32
    %c0_i32_0 = arith.constant 0 : i32
    %c0_i32_1 = arith.constant 0 : i32
    return %c0_i32, %c0_i32_0 : i32, i32
  }
  func.func @transform_3(%arg0: i32) -> (i32, i32) {
    %c0_i32 = arith.constant 0 : i32
    %c0_i32_0 = arith.constant 0 : i32
    %c0_i32_1 = arith.constant 0 : i32
    return %c0_i32, %c0_i32_0 : i32, i32
  }
  func.func @transform_4(%arg0: i32) -> (i32, i32) {
    %c0_i32 = arith.constant 0 : i32
    %c0_i32_0 = arith.constant 0 : i32
    %c0_i32_1 = arith.constant 0 : i32
    return %c0_i32, %c0_i32_0 : i32, i32
  }
  func.func @transform_5(%arg0: i32) -> (i32, i32) {
    %c0_i32 = arith.constant 0 : i32
    %c0_i32_0 = arith.constant 0 : i32
    %c0_i32_1 = arith.constant 0 : i32
    return %c0_i32, %c0_i32_0 : i32, i32
  }
  func.func @transform_6(%arg0: i32) -> (i32, i32) {
    %c0_i32 = arith.constant 0 : i32
    %c0_i32_0 = arith.constant 0 : i32
    %c0_i32_1 = arith.constant 0 : i32
    return %c0_i32, %c0_i32_0 : i32, i32
  }
  func.func @transform_7(%arg0: i32) -> (i32, i32) {
    %c0_i32 = arith.constant 0 : i32
    %c0_i32_0 = arith.constant 0 : i32
    %c0_i32_1 = arith.constant 0 : i32
    return %c0_i32, %c0_i32_0 : i32, i32
  }
  func.func @transform_8(%arg0: i32) -> (i32, i32) {
    %c0_i32 = arith.constant 0 : i32
    %c0_i32_0 = arith.constant 0 : i32
    %c0_i32_1 = arith.constant 0 : i32
    return %c0_i32, %c0_i32_0 : i32, i32
  }
  func.func @transform_9(%arg0: i32) -> (i32, i32) {
    %c0_i32 = arith.constant 0 : i32
    %c0_i32_0 = arith.constant 0 : i32
    %c0_i32_1 = arith.constant 0 : i32
    return %c0_i32, %c0_i32_0 : i32, i32
  }
  func.func @transform_10(%arg0: i32) -> (i32, i32) {
    %c0_i32 = arith.constant 0 : i32
    %c0_i32_0 = arith.constant 0 : i32
    return %arg0, %c0_i32 : i32, i32
  }
}

</mosaic_0001>

<llo_original>
// kernel: forward.1
$region0: #{forward.1}
  #allocation0 [shape = 'u32[]', space=smem, size = 0x4, offset = 0x4, fixed_abs, tag = 'smem constant byte address 0x4 - core index']
  #allocation1 [shape = 'u32[144,128]{1,0:T(1,128)}', space=vmem, size = 0x12000, scoped, tag = 'internal scratch']
  %s0 = inlined_call_operand.vmem [shape: bf16[32,64], index: 0, kind: input, shape index: {}]
  %s1 = inlined_call_operand.vmem [shape: bf16[64,32], index: 1, kind: input, shape index: {}]
  %s2 = inlined_call_operand.vmem [shape: f32[16,32], index: 2, kind: input, shape index: {}]
  %s3 = inlined_call_operand.vmem [shape: f32[1,32], index: 3, kind: input, shape index: {}]
  %s4 = inlined_call_operand.vmem [shape: f32[1,32], index: 4, kind: input, shape index: {}]
  %s5 = inlined_call_operand.vmem [shape: bf16[32,128], index: 5, kind: input, shape index: {}]
  %s6 = inlined_call_operand.vmem [shape: f32[1,128], index: 6, kind: input, shape index: {}, may-alias: {6,9}]
  %s7 = inlined_call_operand.vmem [shape: bf16[32,128], index: 7, kind: input, shape index: {}]
  %s8 = inlined_call_operand.vmem [shape: bf16[128,128], index: 8, kind: input, shape index: {}]
  %s9 = inlined_call_operand.vmem [shape: f32[1,128], index: 9, kind: input, shape index: {}, may-alias: {6,9}]
  %s10 = inlined_call_operand.vmem [shape: bf16[32,128], index: 10, kind: output, shape index: {}]
  %s11 = sld [smem:[#allocation0]]
  $region73: #{forward.1} parent=0
    _
  %s13 = ssub.s32 1, %s11
  %s14 = scalar_select 0, %s13, %s11
  loop: start=0, step=1, limit=4
  $region2: #{forward.1} parent=0 // loop_pre_header
    _
  $region3: #{forward.1} parent=0 // loop_header
    %s16 = sphi 0, %s20
    %p17 = scmp.ge.s32.totalorder %s16, 4
    %s26 = sphi 0, %s28
    %s29 = sphi 0, %s26
    %s30 = sphi 0, %s29
    %s46 = sphi 0, %s30
    %s50 = sphi 0, %s50
    %s52 = sphi 0, %s50
    %s53 = sphi 0, %s52
    %s67 = sphi 0, %s53
    %s71 = sphi 0, %s71
    %s73 = sphi 0, %s71
    %s74 = sphi 0, %s73
    %s88 = sphi 0, %s74
    %s92 = sphi 0, %s92
    %s94 = sphi 0, %s92
    %s95 = sphi 0, %s94
    %s109 = sphi 0, %s95
    %s113 = sphi 0, %s113
    %s115 = sphi 0, %s113
    %s116 = sphi 0, %s115
    %s130 = sphi 0, %s116
    %s134 = sphi 0, %s134
    %s136 = sphi 0, %s134
    %s137 = sphi 0, %s136
    %s151 = sphi 0, %s137
    %s155 = sphi 0, %s155
    %s157 = sphi 0, %s155
    %s158 = sphi 0, %s157
    %s172 = sphi 0, %s158
    %s176 = sphi 0, %s176
    %s178 = sphi 0, %s176
    %s179 = sphi 0, %s178
    %s193 = sphi 0, %s179
    %s197 = sphi 0, %s197
    %s199 = sphi 0, %s197
    %s200 = sphi 0, %s199
    %s214 = sphi 0, %s200
    %s218 = sphi 0, %s218
    %s220 = sphi 0, %s218
    %s221 = sphi 0, %s220
    %s235 = sphi 0, %s221
    %s241 = sphi 0, %s243
    %s244 = sphi 0, %s241
    %s245 = sphi 0, %s244
    %s261 = sphi 0, %s245
  $region4: #{forward.1} parent=0 // loop_header_branch
    %19 = sbr.rel (%p17) target = $region8
  $region5: #{forward.1} parent=0 // loop_body
    %s21 = ssub.s32 %s16, 1
    %s22 = ssub.s32 %s16, 2
    %s23 = sadd.s32 %s16, 1
    %s24 = ssub.s32 %s16, %s23
    %p25 = scmp.eq.s32.totalorder %s24, 0
    %s27 = sadd.s32 %s26, 1
    %s28 = scalar_select %p25, %s26, %s27
    %p31 = pneg %p25
    %p32 = scmp.eq.s32.totalorder %s16, 1
    %p33 = por %p31, %p32
    %p34 = scmp.ne.s32.totalorder %s26, %s29
    %p35 = scmp.eq.s32.totalorder %s16, 0
    %p36 = por %p34, %p35
    %p37 = scmp.ne.s32.totalorder %s26, %s29
    %p38 = scmp.eq.s32.totalorder %s21, 1
    %p39 = por %p37, %p38
    %p40 = scmp.ne.s32.totalorder %s29, %s30
    %p41 = scmp.eq.s32.totalorder %s21, 0
    %p42 = por %p40, %p41
    %p43 = scmp.ne.s32.totalorder %s29, %s30
    %p44 = scmp.eq.s32.totalorder %s22, 1
    %p45 = por %p43, %p44
    %p47 = scmp.ne.s32.totalorder %s30, %s46
    %p48 = scmp.eq.s32.totalorder %s22, 0
    %p49 = por %p47, %p48
    %s51 = sadd.s32 %s50, 1
    %p54 = scmp.eq.s32.totalorder %s16, 1
    %p55 = scmp.ne.s32.totalorder %s50, %s52
    %p56 = scmp.eq.s32.totalorder %s16, 0
    %p57 = por %p55, %p56
    %p58 = scmp.ne.s32.totalorder %s50, %s52
    %p59 = scmp.eq.s32.totalorder %s21, 1
    %p60 = por %p58, %p59
    %p61 = scmp.ne.s32.totalorder %s52, %s53
    %p62 = scmp.eq.s32.totalorder %s21, 0
    %p63 = por %p61, %p62
    %p64 = scmp.ne.s32.totalorder %s52, %s53
    %p65 = scmp.eq.s32.totalorder %s22, 1
    %p66 = por %p64, %p65
    %p68 = scmp.ne.s32.totalorder %s53, %s67
    %p69 = scmp.eq.s32.totalorder %s22, 0
    %p70 = por %p68, %p69
    %s72 = sadd.s32 %s71, 1
    %p75 = scmp.eq.s32.totalorder %s16, 1
    %p76 = scmp.ne.s32.totalorder %s71, %s73
    %p77 = scmp.eq.s32.totalorder %s16, 0
    %p78 = por %p76, %p77
    %p79 = scmp.ne.s32.totalorder %s71, %s73
    %p80 = scmp.eq.s32.totalorder %s21, 1
    %p81 = por %p79, %p80
    %p82 = scmp.ne.s32.totalorder %s73, %s74
    %p83 = scmp.eq.s32.totalorder %s21, 0
    %p84 = por %p82, %p83
    %p85 = scmp.ne.s32.totalorder %s73, %s74
    %p86 = scmp.eq.s32.totalorder %s22, 1
    %p87 = por %p85, %p86
    %p89 = scmp.ne.s32.totalorder %s74, %s88
    %p90 = scmp.eq.s32.totalorder %s22, 0
    %p91 = por %p89, %p90
    %s93 = sadd.s32 %s92, 1
    %p96 = scmp.eq.s32.totalorder %s16, 1
    %p97 = scmp.ne.s32.totalorder %s92, %s94
    %p98 = scmp.eq.s32.totalorder %s16, 0
    %p99 = por %p97, %p98
    %p100 = scmp.ne.s32.totalorder %s92, %s94
    %p101 = scmp.eq.s32.totalorder %s21, 1
    %p102 = por %p100, %p101
    %p103 = scmp.ne.s32.totalorder %s94, %s95
    %p104 = scmp.eq.s32.totalorder %s21, 0
    %p105 = por %p103, %p104
    %p106 = scmp.ne.s32.totalorder %s94, %s95
    %p107 = scmp.eq.s32.totalorder %s22, 1
    %p108 = por %p106, %p107
    %p110 = scmp.ne.s32.totalorder %s95, %s109
    %p111 = scmp.eq.s32.totalorder %s22, 0
    %p112 = por %p110, %p111
    %s114 = sadd.s32 %s113, 1
    %p117 = scmp.eq.s32.totalorder %s16, 1
    %p118 = scmp.ne.s32.totalorder %s113, %s115
    %p119 = scmp.eq.s32.totalorder %s16, 0
    %p120 = por %p118, %p119
    %p121 = scmp.ne.s32.totalorder %s113, %s115
    %p122 = scmp.eq.s32.totalorder %s21, 1
    %p123 = por %p121, %p122
    %p124 = scmp.ne.s32.totalorder %s115, %s116
    %p125 = scmp.eq.s32.totalorder %s21, 0
    %p126 = por %p124, %p125
    %p127 = scmp.ne.s32.totalorder %s115, %s116
    %p128 = scmp.eq.s32.totalorder %s22, 1
    %p129 = por %p127, %p128
    %p131 = scmp.ne.s32.totalorder %s116, %s130
    %p132 = scmp.eq.s32.totalorder %s22, 0
    %p133 = por %p131, %p132
    %s135 = sadd.s32 %s134, 1
    %p138 = scmp.eq.s32.totalorder %s16, 1
    %p139 = scmp.ne.s32.totalorder %s134, %s136
    %p140 = scmp.eq.s32.totalorder %s16, 0
    %p141 = por %p139, %p140
    %p142 = scmp.ne.s32.totalorder %s134, %s136
    %p143 = scmp.eq.s32.totalorder %s21, 1
    %p144 = por %p142, %p143
    %p145 = scmp.ne.s32.totalorder %s136, %s137
    %p146 = scmp.eq.s32.totalorder %s21, 0
    %p147 = por %p145, %p146
    %p148 = scmp.ne.s32.totalorder %s136, %s137
    %p149 = scmp.eq.s32.totalorder %s22, 1
    %p150 = por %p148, %p149
    %p152 = scmp.ne.s32.totalorder %s137, %s151
    %p153 = scmp.eq.s32.totalorder %s22, 0
    %p154 = por %p152, %p153
    %s156 = sadd.s32 %s155, 1
    %p159 = scmp.eq.s32.totalorder %s16, 1
    %p160 = scmp.ne.s32.totalorder %s155, %s157
    %p161 = scmp.eq.s32.totalorder %s16, 0
    %p162 = por %p160, %p161
    %p163 = scmp.ne.s32.totalorder %s155, %s157
    %p164 = scmp.eq.s32.totalorder %s21, 1
    %p165 = por %p163, %p164
    %p166 = scmp.ne.s32.totalorder %s157, %s158
    %p167 = scmp.eq.s32.totalorder %s21, 0
    %p168 = por %p166, %p167
    %p169 = scmp.ne.s32.totalorder %s157, %s158
    %p170 = scmp.eq.s32.totalorder %s22, 1
    %p171 = por %p169, %p170
    %p173 = scmp.ne.s32.totalorder %s158, %s172
    %p174 = scmp.eq.s32.totalorder %s22, 0
    %p175 = por %p173, %p174
    %s177 = sadd.s32 %s176, 1
    %p180 = scmp.eq.s32.totalorder %s16, 1
    %p181 = scmp.ne.s32.totalorder %s176, %s178
    %p182 = scmp.eq.s32.totalorder %s16, 0
    %p183 = por %p181, %p182
    %p184 = scmp.ne.s32.totalorder %s176, %s178
    %p185 = scmp.eq.s32.totalorder %s21, 1
    %p186 = por %p184, %p185
    %p187 = scmp.ne.s32.totalorder %s178, %s179
    %p188 = scmp.eq.s32.totalorder %s21, 0
    %p189 = por %p187, %p188
    %p190 = scmp.ne.s32.totalorder %s178, %s179
    %p191 = scmp.eq.s32.totalorder %s22, 1
    %p192 = por %p190, %p191
    %p194 = scmp.ne.s32.totalorder %s179, %s193
    %p195 = scmp.eq.s32.totalorder %s22, 0
    %p196 = por %p194, %p195
    %s198 = sadd.s32 %s197, 1
    %p201 = scmp.eq.s32.totalorder %s16, 1
    %p202 = scmp.ne.s32.totalorder %s197, %s199
    %p203 = scmp.eq.s32.totalorder %s16, 0
    %p204 = por %p202, %p203
    %p205 = scmp.ne.s32.totalorder %s197, %s199
    %p206 = scmp.eq.s32.totalorder %s21, 1
    %p207 = por %p205, %p206
    %p208 = scmp.ne.s32.totalorder %s199, %s200
    %p209 = scmp.eq.s32.totalorder %s21, 0
    %p210 = por %p208, %p209
    %p211 = scmp.ne.s32.totalorder %s199, %s200
    %p212 = scmp.eq.s32.totalorder %s22, 1
    %p213 = por %p211, %p212
    %p215 = scmp.ne.s32.totalorder %s200, %s214
    %p216 = scmp.eq.s32.totalorder %s22, 0
    %p217 = por %p215, %p216
    %s219 = sadd.s32 %s218, 1
    %p222 = scmp.eq.s32.totalorder %s16, 1
    %p223 = scmp.ne.s32.totalorder %s218, %s220
    %p224 = scmp.eq.s32.totalorder %s16, 0
    %p225 = por %p223, %p224
    %p226 = scmp.ne.s32.totalorder %s218, %s220
    %p227 = scmp.eq.s32.totalorder %s21, 1
    %p228 = por %p226, %p227
    %p229 = scmp.ne.s32.totalorder %s220, %s221
    %p230 = scmp.eq.s32.totalorder %s21, 0
    %p231 = por %p229, %p230
    %p232 = scmp.ne.s32.totalorder %s220, %s221
    %p233 = scmp.eq.s32.totalorder %s22, 1
    %p234 = por %p232, %p233
    %p236 = scmp.ne.s32.totalorder %s221, %s235
    %p237 = scmp.eq.s32.totalorder %s22, 0
    %p238 = por %p236, %p237
    %s239 = ssub.s32 %s16, %s23
    %p240 = scmp.eq.s32.totalorder %s239, 0
    %s242 = sadd.s32 %s241, 1
    %s243 = scalar_select %p240, %s241, %s242
    %p246 = pneg %p240
    %p247 = scmp.eq.s32.totalorder %s16, 1
    %p248 = por %p246, %p247
    %p249 = scmp.ne.s32.totalorder %s241, %s244
    %p250 = scmp.eq.s32.totalorder %s16, 0
    %p251 = por %p249, %p250
    %p252 = scmp.ne.s32.totalorder %s241, %s244
    %p253 = scmp.eq.s32.totalorder %s21, 1
    %p254 = por %p252, %p253
    %p255 = scmp.ne.s32.totalorder %s244, %s245
    %p256 = scmp.eq.s32.totalorder %s21, 0
    %p257 = por %p255, %p256
    %p258 = scmp.ne.s32.totalorder %s244, %s245
    %p259 = scmp.eq.s32.totalorder %s22, 1
    %p260 = por %p258, %p259
    %p262 = scmp.ne.s32.totalorder %s245, %s261
    %p263 = scmp.eq.s32.totalorder %s22, 0
    %p264 = por %p262, %p263
    %p265 = scmp.le.s32.totalorder 1, %s16
    %p266 = scmp.lt.s32.totalorder %s16, 3
    %p267 = pnand %p265, %p266
    %p268 = pneg %p267
    // Predicated region
    $region9: #{forward.1} parent=5 // pred_check
      _
    $region10: #{forward.1} parent=5 // pred_check_branch
      %270 = sbr.rel (%p267) target = $region12
    $region11: #{forward.1} parent=5 // pred_region
      %s271 = ssub.s32 %s16, 1
      // Predicated region
      $region13: #{forward.1} parent=11 // pred_check
        %p272 = pneg %p63
      $region14: #{forward.1} parent=11 // pred_check_branch
        %274 = sbr.rel (%p272) target = $region16
      $region15: #{forward.1} parent=11 // pred_region
        _
      $region16: #{forward.1} parent=11 // pred_fallthru
        _
      // Predicated region
      $region17: #{forward.1} parent=11 // pred_check
        %p275 = pneg %p84
      $region18: #{forward.1} parent=11 // pred_check_branch
        %277 = sbr.rel (%p275) target = $region20
      $region19: #{forward.1} parent=11 // pred_region
        _
      $region20: #{forward.1} parent=11 // pred_fallthru
        _
      // Predicated region
      $region21: #{forward.1} parent=11 // pred_check
        %p278 = pneg %p105
      $region22: #{forward.1} parent=11 // pred_check_branch
        %280 = sbr.rel (%p278) target = $region24
      $region23: #{forward.1} parent=11 // pred_region
        _
      $region24: #{forward.1} parent=11 // pred_fallthru
        _
      // Predicated region
      $region25: #{forward.1} parent=11 // pred_check
        %p281 = pneg %p126
      $region26: #{forward.1} parent=11 // pred_check_branch
        %283 = sbr.rel (%p281) target = $region28
      $region27: #{forward.1} parent=11 // pred_region
        _
      $region28: #{forward.1} parent=11 // pred_fallthru
        _
      // Predicated region
      $region29: #{forward.1} parent=11 // pred_check
        %p284 = pneg %p147
      $region30: #{forward.1} parent=11 // pred_check_branch
        %286 = sbr.rel (%p284) target = $region32
      $region31: #{forward.1} parent=11 // pred_region
        _
      $region32: #{forward.1} parent=11 // pred_fallthru
        _
      // Predicated region
      $region33: #{forward.1} parent=11 // pred_check
        %p287 = pneg %p168
      $region34: #{forward.1} parent=11 // pred_check_branch
        %289 = sbr.rel (%p287) target = $region36
      $region35: #{forward.1} parent=11 // pred_region
        _
      $region36: #{forward.1} parent=11 // pred_fallthru
        _
      // Predicated region
      $region37: #{forward.1} parent=11 // pred_check
        %p290 = pneg %p189
      $region38: #{forward.1} parent=11 // pred_check_branch
        %292 = sbr.rel (%p290) target = $region40
      $region39: #{forward.1} parent=11 // pred_region
        _
      $region40: #{forward.1} parent=11 // pred_fallthru
        _
      // Predicated region
      $region41: #{forward.1} parent=11 // pred_check
        %p293 = pneg %p210
      $region42: #{forward.1} parent=11 // pred_check_branch
        %295 = sbr.rel (%p293) target = $region44
      $region43: #{forward.1} parent=11 // pred_region
        _
      $region44: #{forward.1} parent=11 // pred_fallthru
        _
      // Predicated region
      $region45: #{forward.1} parent=11 // pred_check
        %p296 = pneg %p231
      $region46: #{forward.1} parent=11 // pred_check_branch
        %298 = sbr.rel (%p296) target = $region48
      $region47: #{forward.1} parent=11 // pred_region
        _
      $region48: #{forward.1} parent=11 // pred_fallthru
        _
    $region12: #{forward.1} parent=5 // pred_fallthru
      _
    %p299 = scmp.lt.s32.totalorder %s16, 2
    // Predicated region
    $region49: #{forward.1} parent=5 // pred_check
      %p300 = pneg %p299
    $region50: #{forward.1} parent=5 // pred_check_branch
      %302 = sbr.rel (%p300) target = $region52
    $region51: #{forward.1} parent=5 // pred_region
      // Predicated region
      $region53: #{forward.1} parent=51 // pred_check
        %p303 = pneg %p36
      $region54: #{forward.1} parent=51 // pred_check_branch
        %305 = sbr.rel (%p303) target = $region56
      $region55: #{forward.1} parent=51 // pred_region
        %s306 = smul.u32 2, %s16
        %p307 = scmp.lt.s32.totalorder %s306, 3
        %s308 = scalar_select %p307, %s306, 3
        %s309 = smul.addr %s308, 4
        %s310 = scalar_lea.vmem %s0, %s309
        %s311 = smul.u32 2, %s16
      $region56: #{forward.1} parent=51 // pred_fallthru
        _
    $region52: #{forward.1} parent=5 // pred_fallthru
      _
    %p312 = scmp.le.s32.totalorder 1, %s16
    %p313 = scmp.lt.s32.totalorder %s16, 3
    %p314 = pnand %p312, %p313
    %p315 = pneg %p314
    // Predicated region
    $region57: #{forward.1} parent=5 // pred_check
      _
    $region58: #{forward.1} parent=5 // pred_check_branch
      %317 = sbr.rel (%p314) target = $region60
    $region59: #{forward.1} parent=5 // pred_region
      %s318 = ssub.s32 %s16, 1
      %s319 = smul.u32 2, %s21
      %p320 = scmp.lt.s32.totalorder %s319, 3
      %s321 = scalar_select %p320, %s319, 3
      %s322 = smul.addr %s321, 4
      %s323 = scalar_lea.vmem %s0, %s322
      %p324 = pneg %p42
      %p325 = pneg %p39
      %p326 = pneg %p63
      %p327 = pneg %p60
      %p328 = pneg %p84
      %p329 = pneg %p81
      %p330 = pneg %p105
      %p331 = pneg %p102
      %p332 = pneg %p126
      %p333 = pneg %p123
      %p334 = pneg %p147
      %p335 = pneg %p144
      %p336 = pneg %p168
      %p337 = pneg %p165
      %p338 = pneg %p189
      %p339 = pneg %p186
      %p340 = pneg %p210
      %p341 = pneg %p207
      %p342 = pneg %p231
      %p343 = pneg %p228
      %p344 = pneg %p257
      %p345 = pneg %p254
      %s346 = smul.u32 2, %s21
      %p347 = scmp.lt.s32.totalorder %s346, 3
      %s348 = scalar_select %p347, %s346, 3
      %s349 = smul.addr %s348, 4
      %s350 = scalar_lea.vmem %s10, %s349
      %s351 = smul.u32 2, %s21
      %p352 = scmp.lt.s32.totalorder %s351, 3
      %s353 = scalar_select %p352, %s351, 3
      %s354 = smul.addr %s353, 4
      %s355 = scalar_lea.vmem %s0, %s354
      %s356 = smul.u32 2, %s21
      %s357 = smul.u32 2, %s21
      %p358 = scmp.lt.s32.totalorder %s357, 3
      %s359 = scalar_select %p358, %s357, 3
      %s360 = smul.addr %s359, 4
      %s361 = scalar_lea.vmem %s10, %s360
      %s362 = smul.u32 2, %s21
      %v364 = vld [vmem:[%s355] sm:$0xf]
      %v365 = vld [vmem:[%s355 + $0x4] sm:$0xf]
      %v366 = vld [vmem:[%s1] sm:$0xf]
      %v367 = vld [vmem:[%s1 + $0x4] sm:$0xf]
      %v368 = vld [vmem:[%s1 + $0x8] sm:$0xf]
      %v369 = vld [vmem:[%s1 + $0xc] sm:$0xf]
      %v370 = vld [vmem:[%s1 + $0x10] sm:$0xf]
      %v371 = vld [vmem:[%s1 + $0x14] sm:$0xf]
      %v372 = vld [vmem:[%s1 + $0x18] sm:$0xf]
      %v373 = vld [vmem:[%s1 + $0x1c] sm:$0xf]
      %v374 = vld [vmem:[%s2] sm:$0xff]
      %v375 = vld [vmem:[%s2 + $0x8] sm:$0xff]
      %v378 = vunpack.c.l.b16 %v364
      %v379 = vunpack.c.l.b16 %v365
      %v380 = vpack.c.b16 %v379, %v378
      %v389 = vunpack.c.l.b16 %v366
      %v390 = vunpack.c.l.b16 %v367
      %v391 = vunpack.c.l.b16 %v368
      %v392 = vunpack.c.l.b16 %v369
      %v393 = vunpack.c.l.b16 %v370
      %v394 = vunpack.c.l.b16 %v371
      %v395 = vunpack.c.l.b16 %v372
      %v396 = vunpack.c.l.b16 %v373
      %v397 = vpack.c.b16 %v390, %v389
      %v398 = vpack.c.b16 %v392, %v391
      %v399 = vpack.c.b16 %v394, %v393
      %v400 = vpack.c.b16 %v396, %v395
      %vm405 = vcmask 523264
      %v407 = vsel %vm405, %v380, 0
      %409 = vmatprep.subr.bf16.mxu0 0
      %410 = vmatpush1.bf16.msra.mxu0 %v397
      %411 = vmatprep.subr.bf16.mxu0 0
      %412 = vmatpush1.bf16.msra.mxu0 %v398
      %413 = vmatprep.subr.bf16.mxu0 0
      %414 = vmatpush1.bf16.msra.mxu0 %v399
      %415 = vmatprep.subr.bf16.mxu0 0
      %416 = vmatpush1.bf16.msra.mxu0 %v400
      %417 = vmatprep.subr.bf16.mxu0 0
      %418 = vmatpush1.bf16.msra.mxu0 0
      %419 = vmatprep.subr.bf16.mxu0 0
      %420 = vmatpush1.bf16.msra.mxu0 0
      %421 = vmatprep.subr.bf16.mxu0 0
      %422 = vmatpush1.bf16.msra.mxu0 0
      %423 = vmatprep.subr.bf16.mxu0 0
      %424 = vmatpush1.bf16.msra.mxu0 0
      %425 = vmatprep.subr.bf16.mxu0 0
      %426 = vmatpush1.bf16.msra.mxu0 0
      %427 = vmatprep.subr.bf16.mxu0 0
      %428 = vmatpush1.bf16.msra.mxu0 0
      %429 = vmatprep.subr.bf16.mxu0 0
      %430 = vmatpush1.bf16.msra.mxu0 0
      %431 = vmatprep.subr.bf16.mxu0 0
      %432 = vmatpush1.bf16.msra.mxu0 0
      %433 = vmatprep.subr.bf16.mxu0 0
      %434 = vmatpush1.bf16.msra.mxu0 0
      %435 = vmatprep.subr.bf16.mxu0 0
      %436 = vmatpush1.bf16.msra.mxu0 0
      %437 = vmatprep.subr.bf16.mxu0 0
      %438 = vmatpush1.bf16.msra.mxu0 0
      %439 = vmatprep.subr.bf16.mxu0 0
      %440 = vmatpush1.bf16.msra.mxu0 0
      %441 = vmatprep.mubr.bf16.mxu0 0
      %442 = vmatmul.mubr.bf16.gmra.mrb[0].mxu0 %v407
      %v443 = vpop.f32.mrb[0].mxu0
      %v444 = vadd.f32 %v374, %v443
      %v445 = vpop.f32.mrb[0].mxu0
      %v446 = vpop.f32.mrb[0].mxu0
      %v447 = vadd.f32 %v375, %v446
      %v448 = vpop.f32.mrb[0].mxu0
      %449 = vdwg.mxu0
      %vm450 = vcmask 261120
      %v451 = vsel %vm450, %v444, 0.0
      %452 = vadd.xlane.f32.xlu0 %v451
      %v453 = vpop.xlane.xlu0 %452
      %v454 = vsel %vm450, %v447, 0.0
      %455 = vadd.xlane.f32.xlu0 %v454
      %v456 = vpop.xlane.xlu0 %455
      %v457 = vmul.f32 %v444, %v444
      %v458 = vmul.f32 %v447, %v447
      %v459 = vsel %vm450, %v457, 0.0
      %460 = vadd.xlane.f32.xlu0 %v459
      %v461 = vpop.xlane.xlu0 %460
      %v462 = vsel %vm450, %v458, 0.0
      %463 = vadd.xlane.f32.xlu0 %v462
      %v464 = vpop.xlane.xlu0 %463
      %v465 = vmul.f32 %v453, 0.03125
      %v466 = vmul.f32 %v456, 0.03125
      %v467 = vmul.f32 %v461, 0.03125
      %v468 = vmul.f32 %v464, 0.03125
      %v469 = vmul.f32 %v465, %v465
      %v470 = vmul.f32 %v466, %v466
      %v471 = vsub.f32 %v467, %v469
      %v472 = vsub.f32 %v468, %v470
      %v473 = vsub.f32 %v444, %v465
      %v474 = vsub.f32 %v447, %v466
      %v475 = vadd.f32 %v471, 1e-05
      %v476 = vadd.f32 %v472, 1e-05
      %v477 = vrsqrt.pop %v475
      %v478 = vrsqrt.pop %v476
      %v479 = vmul.f32 %v473, %v477
      %v480 = vmul.f32 %v474, %v478
      %v481 = vld [vmem:[%s3] sm:$0x1]
      %v483 = vlaneseq
      %v484 = vshrl.u32 %v483, 7
      %v485 = vsub.s32 0, %v484
      %v486 = vrot.slane %v481, %v485
      %v488 = vmul.f32 %v479, %v486
      %v489 = vmul.f32 %v480, %v486
      %v490 = vld [vmem:[%s4] sm:$0x1]
      %v492 = vlaneseq
      %v493 = vshrl.u32 %v492, 7
      %v494 = vsub.s32 0, %v493
      %v495 = vrot.slane %v490, %v494
      %v497 = vadd.f32 %v488, %v495
      %v498 = vadd.f32 %v489, %v495
      %v499 = vpack.c.bf16 %v498, %v497
      %v500 = vld [vmem:[%s5] sm:$0xf]
      %v501 = vld [vmem:[%s5 + $0x4] sm:$0xf]
      %v502 = vld [vmem:[%s5 + $0x8] sm:$0xf]
      %v503 = vld [vmem:[%s5 + $0xc] sm:$0xf]
      %v504 = vld [vmem:[%s6] sm:$0x1]
      %v506 = vlaneseq
      %v507 = vshrl.u32 %v506, 7
      %v508 = vsub.s32 0, %v507
      %v509 = vrot.slane %v504, %v508
      %v515 = vunpack.c.l.b16 %v500
      %v516 = vunpack.c.l.b16 %v501
      %v517 = vunpack.c.l.b16 %v502
      %v518 = vunpack.c.l.b16 %v503
      %v519 = vpack.c.b16 %v516, %v515
      %v520 = vpack.c.b16 %v518, %v517
      %v524 = vsel %vm450, %v499, 0
      %526 = vmatprep.subr.bf16.mxu0 0
      %527 = vmatpush1.bf16.msra.mxu0 %v519
      %528 = vmatprep.subr.bf16.mxu0 0
      %529 = vmatpush1.bf16.msra.mxu0 %v520
      %530 = vmatprep.subr.bf16.mxu0 0
      %531 = vmatpush1.bf16.msra.mxu0 0
      %532 = vmatprep.subr.bf16.mxu0 0
      %533 = vmatpush1.bf16.msra.mxu0 0
      %534 = vmatprep.subr.bf16.mxu0 0
      %535 = vmatpush1.bf16.msra.mxu0 0
      %536 = vmatprep.subr.bf16.mxu0 0
      %537 = vmatpush1.bf16.msra.mxu0 0
      %538 = vmatprep.subr.bf16.mxu0 0
      %539 = vmatpush1.bf16.msra.mxu0 0
      %540 = vmatprep.subr.bf16.mxu0 0
      %541 = vmatpush1.bf16.msra.mxu0 0
      %542 = vmatprep.subr.bf16.mxu0 0
      %543 = vmatpush1.bf16.msra.mxu0 0
      %544 = vmatprep.subr.bf16.mxu0 0
      %545 = vmatpush1.bf16.msra.mxu0 0
      %546 = vmatprep.subr.bf16.mxu0 0
      %547 = vmatpush1.bf16.msra.mxu0 0
      %548 = vmatprep.subr.bf16.mxu0 0
      %549 = vmatpush1.bf16.msra.mxu0 0
      %550 = vmatprep.subr.bf16.mxu0 0
      %551 = vmatpush1.bf16.msra.mxu0 0
      %552 = vmatprep.subr.bf16.mxu0 0
      %553 = vmatpush1.bf16.msra.mxu0 0
      %554 = vmatprep.subr.bf16.mxu0 0
      %555 = vmatpush1.bf16.msra.mxu0 0
      %556 = vmatprep.subr.bf16.mxu0 0
      %557 = vmatpush1.bf16.msra.mxu0 0
      %558 = vmatprep.mubr.bf16.mxu0 0
      %559 = vmatmul.mubr.bf16.gmra.mrb[0].mxu0 %v524
      %v560 = vpop.f32.mrb[0].mxu0
      %v561 = vadd.f32 %v509, %v560
      %v562 = vpop.f32.mrb[0].mxu0
      %v563 = vpop.f32.mrb[0].mxu0
      %v564 = vadd.f32 %v509, %v563
      %v565 = vpop.f32.mrb[0].mxu0
      %566 = vdwg.mxu0
      %v567 = vmul.f32 %v561, 0.5
      %v568 = vmul.f32 %v564, 0.5
      %v569 = vmul.f32 %v561, 0.044715
      %v570 = vmul.f32 %v564, 0.044715
      %v571 = vmul.f32 %v569, %v561
      %v572 = vmul.f32 %v570, %v564
      %v573 = vmul.f32 %v571, %v561
      %v574 = vmul.f32 %v572, %v564
      %v575 = vadd.f32 %v561, %v573
      %v576 = vadd.f32 %v564, %v574
      %v577 = vmul.f32 %v575, 0.7978846
      %v578 = vmul.f32 %v576, 0.7978846
      %v579 = vtanh.pop %v577
      %v580 = vtanh.pop %v578
      %v581 = vadd.f32 %v579, 1.0
      %v582 = vadd.f32 %v580, 1.0
      %v583 = vmul.f32 %v567, %v581
      %v584 = vmul.f32 %v568, %v582
      %v585 = vpack.c.bf16 %v447, %v444
      %v586 = vld [vmem:[%s7] sm:$0xf]
      %v587 = vld [vmem:[%s7 + $0x4] sm:$0xf]
      %v588 = vld [vmem:[%s7 + $0x8] sm:$0xf]
      %v589 = vld [vmem:[%s7 + $0xc] sm:$0xf]
      %v590 = vpack.c.bf16 %v584, %v583
      %v591 = vld [vmem:[%s8] sm:$0xf]
      %v592 = vld [vmem:[%s8 + $0x4] sm:$0xf]
      %v593 = vld [vmem:[%s8 + $0x8] sm:$0xf]
      %v594 = vld [vmem:[%s8 + $0xc] sm:$0xf]
      %v595 = vld [vmem:[%s8 + $0x10] sm:$0xf]
      %v596 = vld [vmem:[%s8 + $0x14] sm:$0xf]
      %v597 = vld [vmem:[%s8 + $0x18] sm:$0xf]
      %v598 = vld [vmem:[%s8 + $0x1c] sm:$0xf]
      %v599 = vld [vmem:[%s8 + $0x20] sm:$0xf]
      %v600 = vld [vmem:[%s8 + $0x24] sm:$0xf]
      %v601 = vld [vmem:[%s8 + $0x28] sm:$0xf]
      %v602 = vld [vmem:[%s8 + $0x2c] sm:$0xf]
      %v603 = vld [vmem:[%s8 + $0x30] sm:$0xf]
      %v604 = vld [vmem:[%s8 + $0x34] sm:$0xf]
      %v605 = vld [vmem:[%s8 + $0x38] sm:$0xf]
      %v606 = vld [vmem:[%s8 + $0x3c] sm:$0xf]
      %v623 = vunpack.c.l.b16 %v591
      %v624 = vunpack.c.l.b16 %v592
      %v625 = vunpack.c.l.b16 %v593
      %v626 = vunpack.c.l.b16 %v594
      %v627 = vunpack.c.l.b16 %v595
      %v628 = vunpack.c.l.b16 %v596
      %v629 = vunpack.c.l.b16 %v597
      %v630 = vunpack.c.l.b16 %v598
      %v631 = vunpack.c.l.b16 %v599
      %v632 = vunpack.c.l.b16 %v600
      %v633 = vunpack.c.l.b16 %v601
      %v634 = vunpack.c.l.b16 %v602
      %v635 = vunpack.c.l.b16 %v603
      %v636 = vunpack.c.l.b16 %v604
      %v637 = vunpack.c.l.b16 %v605
      %v638 = vunpack.c.l.b16 %v606
      %v639 = vpack.c.b16 %v624, %v623
      %v640 = vpack.c.b16 %v626, %v625
      %v641 = vpack.c.b16 %v628, %v627
      %v642 = vpack.c.b16 %v630, %v629
      %v643 = vpack.c.b16 %v632, %v631
      %v644 = vpack.c.b16 %v634, %v633
      %v645 = vpack.c.b16 %v636, %v635
      %v646 = vpack.c.b16 %v638, %v637
      %655 = vmatprep.subr.bf16.mxu0 0
      %656 = vmatpush1.bf16.msra.mxu0 %v639
      %657 = vmatprep.subr.bf16.mxu0 0
      %658 = vmatpush1.bf16.msra.mxu0 %v640
      %659 = vmatprep.subr.bf16.mxu0 0
      %660 = vmatpush1.bf16.msra.mxu0 %v641
      %661 = vmatprep.subr.bf16.mxu0 0
      %662 = vmatpush1.bf16.msra.mxu0 %v642
      %663 = vmatprep.subr.bf16.mxu0 0
      %664 = vmatpush1.bf16.msra.mxu0 %v643
      %665 = vmatprep.subr.bf16.mxu0 0
      %666 = vmatpush1.bf16.msra.mxu0 %v644
      %667 = vmatprep.subr.bf16.mxu0 0
      %668 = vmatpush1.bf16.msra.mxu0 %v645
      %669 = vmatprep.subr.bf16.mxu0 0
      %670 = vmatpush1.bf16.msra.mxu0 %v646
      %671 = vmatprep.subr.bf16.mxu0 0
      %672 = vmatpush1.bf16.msra.mxu0 0
      %673 = vmatprep.subr.bf16.mxu0 0
      %674 = vmatpush1.bf16.msra.mxu0 0
      %675 = vmatprep.subr.bf16.mxu0 0
      %676 = vmatpush1.bf16.msra.mxu0 0
      %677 = vmatprep.subr.bf16.mxu0 0
      %678 = vmatpush1.bf16.msra.mxu0 0
      %679 = vmatprep.subr.bf16.mxu0 0
      %680 = vmatpush1.bf16.msra.mxu0 0
      %681 = vmatprep.subr.bf16.mxu0 0
      %682 = vmatpush1.bf16.msra.mxu0 0
      %683 = vmatprep.subr.bf16.mxu0 0
      %684 = vmatpush1.bf16.msra.mxu0 0
      %685 = vmatprep.subr.bf16.mxu0 0
      %686 = vmatpush1.bf16.msra.mxu0 0
      %687 = vmatprep.mubr.bf16.mxu0 0
      %688 = vmatmul.mubr.bf16.gmra.mrb[0].mxu0 %v590
      %v689 = vpop.f32.mrb[0].mxu0
      %v690 = vadd.f32 0.0, %v689
      %v691 = vpop.f32.mrb[0].mxu0
      %v692 = vpop.f32.mrb[0].mxu0
      %v693 = vadd.f32 0.0, %v692
      %v694 = vpop.f32.mrb[0].mxu0
      %695 = vdwg.mxu0
      %v700 = vunpack.c.l.b16 %v586
      %v701 = vunpack.c.l.b16 %v587
      %v702 = vunpack.c.l.b16 %v588
      %v703 = vunpack.c.l.b16 %v589
      %v704 = vpack.c.b16 %v701, %v700
      %v705 = vpack.c.b16 %v703, %v702
      %v709 = vsel %vm450, %v585, 0
      %711 = vmatprep.subr.bf16.mxu0 0
      %712 = vmatpush1.bf16.msra.mxu0 %v704
      %713 = vmatprep.subr.bf16.mxu0 0
      %714 = vmatpush1.bf16.msra.mxu0 %v705
      %715 = vmatprep.subr.bf16.mxu0 0
      %716 = vmatpush1.bf16.msra.mxu0 0
      %717 = vmatprep.subr.bf16.mxu0 0
      %718 = vmatpush1.bf16.msra.mxu0 0
      %719 = vmatprep.subr.bf16.mxu0 0
      %720 = vmatpush1.bf16.msra.mxu0 0
      %721 = vmatprep.subr.bf16.mxu0 0
      %722 = vmatpush1.bf16.msra.mxu0 0
      %723 = vmatprep.subr.bf16.mxu0 0
      %724 = vmatpush1.bf16.msra.mxu0 0
      %725 = vmatprep.subr.bf16.mxu0 0
      %726 = vmatpush1.bf16.msra.mxu0 0
      %727 = vmatprep.subr.bf16.mxu0 0
      %728 = vmatpush1.bf16.msra.mxu0 0
      %729 = vmatprep.subr.bf16.mxu0 0
      %730 = vmatpush1.bf16.msra.mxu0 0
      %731 = vmatprep.subr.bf16.mxu0 0
      %732 = vmatpush1.bf16.msra.mxu0 0
      %733 = vmatprep.subr.bf16.mxu0 0
      %734 = vmatpush1.bf16.msra.mxu0 0
      %735 = vmatprep.subr.bf16.mxu0 0
      %736 = vmatpush1.bf16.msra.mxu0 0
      %737 = vmatprep.subr.bf16.mxu0 0
      %738 = vmatpush1.bf16.msra.mxu0 0
      %739 = vmatprep.subr.bf16.mxu0 0
      %740 = vmatpush1.bf16.msra.mxu0 0
      %741 = vmatprep.subr.bf16.mxu0 0
      %742 = vmatpush1.bf16.msra.mxu0 0
      %743 = vmatprep.mubr.bf16.mxu0 0
      %744 = vmatmul.mubr.bf16.gmra.mrb[0].mxu0 %v709
      %v745 = vpop.f32.mrb[0].mxu0
      %v746 = vadd.f32 %v690, %v745
      %v747 = vpop.f32.mrb[0].mxu0
      %v748 = vpop.f32.mrb[0].mxu0
      %v749 = vadd.f32 %v693, %v748
      %v750 = vpop.f32.mrb[0].mxu0
      %751 = vdwg.mxu0
      %v752 = vld [vmem:[%s9] sm:$0x1]
      %v754 = vlaneseq
      %v755 = vshrl.u32 %v754, 7
      %v756 = vsub.s32 0, %v755
      %v757 = vrot.slane %v752, %v756
      %v759 = vadd.f32 %v746, %v757
      %v760 = vadd.f32 %v749, %v757
      %v761 = vpack.c.bf16 %v760, %v759
      %v763 = vunpack.c.l.b16 %v761
      %v764 = vunpack.c.h.b16 %v761
      %v765 = vpack.c.b16 %v763, %v763
      %v766 = vpack.c.b16 %v764, %v764
      %769 = vst [vmem:[%s361] sm:$0xf] %v765
      %770 = vst [vmem:[%s361 + $0x4] sm:$0xf] %v766
      %s771 = smul.u32 2, %s21
      %p772 = scmp.lt.s32.totalorder %s771, 3
      %s773 = scalar_select %p772, %s771, 3
      %s774 = smul.addr %s773, 4
      %s775 = scalar_lea.vmem %s10, %s774
      // Predicated region
      $region61: #{forward.1} parent=59 // pred_check
        %p776 = pneg %p254
      $region62: #{forward.1} parent=59 // pred_check_branch
        %778 = sbr.rel (%p776) target = $region64
      $region63: #{forward.1} parent=59 // pred_region
        %s779 = smul.u32 2, %s21
      $region64: #{forward.1} parent=59 // pred_fallthru
        _
    $region60: #{forward.1} parent=5 // pred_fallthru
      _
    %p780 = scmp.le.s32.totalorder 2, %s16
    // Predicated region
    $region65: #{forward.1} parent=5 // pred_check
      %p781 = pneg %p780
    $region66: #{forward.1} parent=5 // pred_check_branch
      %783 = sbr.rel (%p781) target = $region68
    $region67: #{forward.1} parent=5 // pred_region
      %s784 = ssub.s32 %s16, 2
      // Predicated region
      $region69: #{forward.1} parent=67 // pred_check
        %p785 = pneg %p260
      $region70: #{forward.1} parent=67 // pred_check_branch
        %787 = sbr.rel (%p785) target = $region72
      $region71: #{forward.1} parent=67 // pred_region
        %s788 = smul.u32 2, %s22
        %p789 = scmp.lt.s32.totalorder %s788, 3
        %s790 = scalar_select %p789, %s788, 3
        %s791 = smul.addr %s790, 4
        %s792 = scalar_lea.vmem %s10, %s791
      $region72: #{forward.1} parent=67 // pred_fallthru
        _
    $region68: #{forward.1} parent=5 // pred_fallthru
      _
  $region6: #{forward.1} parent=0 // loop_footer
    %s20 = sadd.s32 1, %s16
  $region7: #{forward.1} parent=0 // loop_footer_branch
    %15 = sbr.rel target = $region3
  $region8: #{forward.1} parent=0 // loop_exit
    _

</llo_original>
